<compile_context>
chip_gen: v5e
topology: v5e:2x2
jax: 0.10.0
libtpu: 0.0.40
codegen_flags: <defaults>
</compile_context>

<pallas_src>
import jax
import jax.numpy as jnp
from jax.experimental import pallas as pl
from jax.experimental.pallas import tpu as pltpu

CONTEXT_SIZE = 5
EMBEDDING_DIM = 16
NUM_NEURONS = 256

_NEG_INF = -1e30  # finite "-inf" for padded vocab columns (exp() -> exactly 0)


def _round_up(x, m):
    return (x + m - 1) // m * m


# --------------------------------------------------------------------------- #
# Kernel
# --------------------------------------------------------------------------- #
def _ngram_mlp_kernel(x_ref, w1_ref, b1_ref, w2_ref, b2_ref, o_ref,
                      h_ref, m_ref, l_ref):
    # x_ref:   (TB, IN_PAD)          bf16  current batch block (zero-padded K)
    # w1_ref:  (IN_PAD, NUM_NEURONS) bf16
    # b1_ref:  (1, NUM_NEURONS)      f32
    # w2_ref:  (NUM_NEURONS, TN)     bf16  current vocab tile
    # b2_ref:  (1, TN)               f32   (-1e30 on padded vocab columns)
    # o_ref:   (TB, V_PAD)           f32   resident across the vocab grid axis
    # h_ref:   (TB, NUM_NEURONS)     bf16  scratch: post-ReLU hidden activations
    # m_ref:   (TB, 1)               f32   scratch: running row max
    # l_ref:   (TB, 1)               f32   scratch: running sum of exp
    j = pl.program_id(1)
    nj = pl.num_programs(1)
    tn = w2_ref.shape[1]

    # Hidden layer once per batch block, reused across all vocab tiles.
    @pl.when(j == 0)
    def _():
        h = jnp.dot(x_ref[...], w1_ref[...], preferred_element_type=jnp.float32)
        h = jnp.maximum(h + b1_ref[...], 0.0)          # bias + ReLU in f32
        h_ref[...] = h.astype(h_ref.dtype)             # bf16 for the MXU stream
        m_ref[...] = jnp.full_like(m_ref, _NEG_INF)
        l_ref[...] = jnp.zeros_like(l_ref)

    # This vocab tile's raw logits (bf16 MXU operands, f32 accumulate), written
    # straight into the resident output block (lane-dense, tn % 128 == 0).
    logits = jnp.dot(h_ref[...], w2_ref[...], preferred_element_type=jnp.float32)
    logits = logits + b2_ref[...]
    col = pl.multiple_of(j * tn, tn)
    o_ref[:, pl.ds(col, tn)] = logits

    # Online softmax statistics update.
    m_old = m_ref[...]
    m_new = jnp.maximum(m_old, jnp.max(logits, axis=-1, keepdims=True))
    l_ref[...] = (l_ref[...] * jnp.exp(m_old - m_new)
                  + jnp.sum(jnp.exp(logits - m_new), axis=-1, keepdims=True))
    m_ref[...] = m_new

    # Final vocab tile: normalize the whole resident block in place.
    @pl.when(j == nj - 1)
    def _():
        o_ref[...] = o_ref[...] - (m_ref[...] + jnp.log(l_ref[...]))


# --------------------------------------------------------------------------- #
# Host-side wrappers
# --------------------------------------------------------------------------- #
def prepare_params(embeddings, w1, b1, w2, b2, max_tn=2048):
    """One-time weight cast + pad (hoisted out of the per-call hot path)."""
    V = w2.shape[1]
    in_dim = CONTEXT_SIZE * EMBEDDING_DIM
    in_pad = _round_up(in_dim, 128)                    # 80 -> 128
    tn = min(_round_up(V, 128), max_tn)                # vocab tile, 128-aligned
    v_pad = _round_up(V, tn)

    w1_p = jnp.zeros((in_pad, NUM_NEURONS), jnp.bfloat16).at[:in_dim, :].set(
        w1.astype(jnp.bfloat16))
    b1_p = b1.reshape(1, NUM_NEURONS).astype(jnp.float32)
    w2_p = jnp.zeros((NUM_NEURONS, v_pad), jnp.bfloat16).at[:, :V].set(
        w2.astype(jnp.bfloat16))
    b2_p = jnp.full((1, v_pad), _NEG_INF, jnp.float32).at[0, :V].set(
        b2.astype(jnp.float32))

    return dict(embeddings=embeddings, w1=w1_p, b1=b1_p, w2=w2_p, b2=b2_p,
                V=V, in_dim=in_dim, in_pad=in_pad, tn=tn, v_pad=v_pad)


def _vmem_capacity_bytes():
    try:
        return int(pltpu.get_tpu_info().vmem_capacity_bytes)
    except Exception:
        return 64 * 1024 * 1024        # conservative (v7x per-core VMEM)


def _vmem_need(tb, in_pad, tn, v_pad):
    return (2 * tb * in_pad * 2                       # x blocks (bf16, dbl-buf)
            + 2 * in_pad * NUM_NEURONS * 2            # w1 (bf16, dbl-buf)
            + 2 * 8 * NUM_NEURONS * 4                 # b1 (padded sublanes)
            + 2 * NUM_NEURONS * tn * 2                # w2 tile (bf16, dbl-buf)
            + 2 * 8 * tn * 4                          # b2 tile
            + 2 * tb * v_pad * 4                      # resident output block
            + tb * NUM_NEURONS * 2                    # hidden scratch (bf16)
            + 2 * tb * 128 * 4)                       # m/l scratch (padded)


def ngram_forward(inputs, params):
    """inputs: int32 (B, CONTEXT_SIZE); returns log-probs (B, vocab_size) f32."""
    B = inputs.shape[0]
    V, in_dim, in_pad = params["V"], params["in_dim"], params["in_pad"]
    tn, v_pad = params["tn"], params["v_pad"]
    nj = v_pad // tn

    # Embedding gather + flatten (plain-JAX glue around the kernel).
    # TODO(synk): fuse this gather into the kernel via scalar-prefetched token
    # ids (PrefetchScalarGridSpec(num_scalar_prefetch=1)) + in-kernel row DMA.
    x = jnp.take(params["embeddings"], inputs, axis=0).reshape(B, in_dim)

    # Batch tile: multiple of 16 (bf16 native sublane tile), shrunk until the
    # VMEM estimate fits ~85% of physical capacity (output block dominates at
    # large V).  For B <= tile this gives a single batch block; splitting a
    # small batch would only double w2 HBM streaming on a memory-bound kernel.
    vmem_cap = _vmem_capacity_bytes()
    vmem_budget = int(vmem_cap * 0.85)
    tb = min(_round_up(B, 16), 256)
    while tb > 16 and _vmem_need(tb, in_pad, tn, v_pad) > vmem_budget:
        tb //= 2
    b_pad = _round_up(B, tb)
    grid = (b_pad // tb, nj)

    x_p = jnp.zeros((b_pad, in_pad), jnp.bfloat16).at[:B, :in_dim].set(
        x.astype(jnp.bfloat16))

    vmem_limit = int(min(vmem_budget,
                         max(32 * 1024 * 1024,
                             2 * _vmem_need(tb, in_pad, tn, v_pad))))

    flops = (2 * b_pad * in_pad * NUM_NEURONS
             + 2 * b_pad * NUM_NEURONS * v_pad
             + 5 * b_pad * v_pad)
    bytes_accessed = (x_p.size * 2
                      + params["w1"].size * 2 + params["b1"].size * 4
                      + params["w2"].size * 2 + params["b2"].size * 4
                      + b_pad * v_pad * 4)

    out = pl.pallas_call(
        _ngram_mlp_kernel,
        out_shape=jax.ShapeDtypeStruct((b_pad, v_pad), jnp.float32),
        grid_spec=pltpu.PrefetchScalarGridSpec(
            num_scalar_prefetch=0,
            grid=grid,
            in_specs=[
                pl.BlockSpec((tb, in_pad), lambda i, j: (i, 0)),
                pl.BlockSpec((in_pad, NUM_NEURONS), lambda i, j: (0, 0)),
                pl.BlockSpec((1, NUM_NEURONS), lambda i, j: (0, 0)),
                pl.BlockSpec((NUM_NEURONS, tn), lambda i, j: (0, j)),
                pl.BlockSpec((1, tn), lambda i, j: (0, j)),
            ],
            out_specs=pl.BlockSpec((tb, v_pad), lambda i, j: (i, 0)),
            scratch_shapes=[
                pltpu.VMEM((tb, NUM_NEURONS), jnp.bfloat16),  # hidden acts
                pltpu.VMEM((tb, 1), jnp.float32),             # running max
                pltpu.VMEM((tb, 1), jnp.float32),             # running sum(exp)
            ],
        ),
        compiler_params=pltpu.CompilerParams(
            dimension_semantics=("parallel", "arbitrary"),
            vmem_limit_bytes=vmem_limit,
        ),
        cost_estimate=pl.CostEstimate(
            flops=int(flops),
            transcendentals=int(b_pad * v_pad + b_pad * nj),
            bytes_accessed=int(bytes_accessed),
        ),
    )(x_p, params["w1"], params["b1"], params["w2"], params["b2"])
    return out[:B, :V]


# --------------------------------------------------------------------------- #
# Init + reference + test
# --------------------------------------------------------------------------- #
def init_params(key, vocab_size):
    """Deterministic synthetic init mirroring the PyTorch module's shapes."""
    k_emb, k_w1, k_b1, k_w2, k_b2 = jax.random.split(key, 5)
    in_dim = CONTEXT_SIZE * EMBEDDING_DIM
    embeddings = jax.random.uniform(k_emb, (vocab_size, EMBEDDING_DIM), jnp.float32)
    lim1 = 1.0 / jnp.sqrt(in_dim)
    w1 = jax.random.uniform(k_w1, (in_dim, NUM_NEURONS), jnp.float32, -lim1, lim1)
    b1 = jax.random.uniform(k_b1, (NUM_NEURONS,), jnp.float32, -lim1, lim1)
    lim2 = 1.0 / jnp.sqrt(NUM_NEURONS)
    w2 = jax.random.uniform(k_w2, (NUM_NEURONS, vocab_size), jnp.float32, -lim2, lim2)
    b2 = jax.random.uniform(k_b2, (vocab_size,), jnp.float32, -lim2, lim2)
    return embeddings, w1, b1, w2, b2


def _reference(inputs, embeddings, w1, b1, w2, b2):
    # Pure-JAX reference with the same bf16-MXU / f32-accumulate math as the kernel.
    x = jnp.take(embeddings, inputs, axis=0).reshape(inputs.shape[0], -1)
    h = jnp.maximum(
        jnp.dot(x.astype(jnp.bfloat16), w1.astype(jnp.bfloat16),
                preferred_element_type=jnp.float32) + b1, 0.0)
    logits = jnp.dot(h.astype(jnp.bfloat16), w2.astype(jnp.bfloat16),
                     preferred_element_type=jnp.float32) + b2
    return jax.nn.log_softmax(logits, axis=1)


if __name__ == "__main__":
    key = jax.random.PRNGKey(0)
    # (V=128, B=8):  single tile, single batch block.
    # (V=1000, B=13): vocab padding 1000 -> 1024, batch padding 13 -> 16.
    # (V=5000, B=29): vocab tiling nj=3 (tn=2048, v_pad=6144) -> exercises the
    #                 online log_softmax across multiple vocab tiles.
    for vocab_size, batch in [(128, 8), (1000, 13), (5000, 29)]:
        k_params, k_inp, key = jax.random.split(key, 3)
        embeddings, w1, b1, w2, b2 = init_params(k_params, vocab_size)
        inputs = jax.random.randint(k_inp, (batch, CONTEXT_SIZE), 0, vocab_size,
                                    dtype=jnp.int32)

        params = prepare_params(embeddings, w1, b1, w2, b2)
        log_probs = ngram_forward(inputs, params)
        jax.block_until_ready(log_probs)

        ref = _reference(inputs, embeddings, w1, b1, w2, b2)
        assert log_probs.shape == (batch, vocab_size)
        assert jnp.allclose(log_probs, ref, atol=1e-2, rtol=1e-2), (
            vocab_size, batch, float(jnp.max(jnp.abs(log_probs - ref))))

    print("KERNEL_OK")
</pallas_src>

<mosaic_0001>
module attributes {stable_mosaic.version = 11 : i64} {
  func.func @_ngram_mlp_kernel(%arg0: i32, %arg1: i32, %arg2: memref<16x128xbf16, #tpu.memory_space<vmem>>, %arg3: memref<128x256xbf16, #tpu.memory_space<vmem>>, %arg4: memref<1x256xf32, #tpu.memory_space<vmem>>, %arg5: memref<256x128xbf16, #tpu.memory_space<vmem>>, %arg6: memref<1x128xf32, #tpu.memory_space<vmem>>, %arg7: memref<16x128xf32, #tpu.memory_space<vmem>>, %arg8: memref<16x256xbf16, #tpu.memory_space<vmem>>, %arg9: memref<16x1xf32, #tpu.memory_space<vmem>>, %arg10: memref<16x1xf32, #tpu.memory_space<vmem>>) attributes {dimension_semantics = [#tpu.dimension_semantics<parallel>, #tpu.dimension_semantics<arbitrary>], iteration_bounds = array<i64: 1, 1>, scalar_prefetch = 0 : i64, scratch_operands = 3 : i64, tpu.core_type = #tpu.core_type<tc>, window_params = [{transform_indices = @transform_0, window_bounds = array<i64: 16, 128>}, {pipeline_mode = #tpu.pipeline_mode<synchronous>, transform_indices = @transform_1, window_bounds = array<i64: 128, 256>}, {pipeline_mode = #tpu.pipeline_mode<synchronous>, transform_indices = @transform_2, window_bounds = array<i64: 1, 256>}, {transform_indices = @transform_3, window_bounds = array<i64: 256, 128>}, {transform_indices = @transform_4, window_bounds = array<i64: 1, 128>}, {transform_indices = @transform_5, window_bounds = array<i64: 16, 128>}]} {
    %c0_i32 = arith.constant 0 : i32
    %0 = arith.cmpi eq, %arg1, %c0_i32 : i32
    %1 = arith.extui %0 : i1 to i32
    %c0_i32_0 = arith.constant 0 : i32
    %2 = arith.cmpi ne, %1, %c0_i32_0 : i32
    scf.if %2 {
      %c0_19 = arith.constant 0 : index
      %c0_20 = arith.constant 0 : index
      %32 = vector.load %arg2[%c0_19, %c0_20] : memref<16x128xbf16, #tpu.memory_space<vmem>>, vector<16x128xbf16>
      %c0_21 = arith.constant 0 : index
      %c0_22 = arith.constant 0 : index
      %33 = vector.load %arg3[%c0_21, %c0_22] : memref<128x256xbf16, #tpu.memory_space<vmem>>, vector<128x256xbf16>
      %cst_23 = arith.constant dense<0.000000e+00> : vector<16x256xf32>
      %34 = tpu.matmul %32, %33, %cst_23 {dimension_numbers = #tpu.dot_dimension_numbers<[1], [0], [0], [1], [0, 0, 1, 1], [], []>} : vector<16x128xbf16>, vector<128x256xbf16>, vector<16x256xf32> -> vector<16x256xf32>
      %c0_24 = arith.constant 0 : index
      %c0_25 = arith.constant 0 : index
      %35 = vector.load %arg4[%c0_24, %c0_25] : memref<1x256xf32, #tpu.memory_space<vmem>>, vector<1x256xf32>
      %36 = vector.broadcast %35 : vector<1x256xf32> to vector<16x256xf32>
      %37 = arith.addf %34, %36 : vector<16x256xf32>
      %cst_26 = arith.constant 0.000000e+00 : f32
      %38 = vector.broadcast %cst_26 : f32 to vector<16x256xf32>
      %39 = arith.maximumf %37, %38 : vector<16x256xf32>
      %40 = arith.truncf %39 : vector<16x256xf32> to vector<16x256xbf16>
      %c0_27 = arith.constant 0 : index
      %c0_28 = arith.constant 0 : index
      %41 = vector.load %arg8[%c0_27, %c0_28] : memref<16x256xbf16, #tpu.memory_space<vmem>>, vector<16x256xbf16>
      tpu.vector_store %arg8[%c0_27, %c0_28], %40 {strides = array<i32>} : memref<16x256xbf16, #tpu.memory_space<vmem>>, vector<16x256xbf16>,
      %cst_29 = arith.constant -1.000000e+30 : f32
      %42 = vector.broadcast %cst_29 : f32 to vector<16x1xf32>
      %c0_30 = arith.constant 0 : index
      %c0_31 = arith.constant 0 : index
      %43 = vector.load %arg9[%c0_30, %c0_31] : memref<16x1xf32, #tpu.memory_space<vmem>>, vector<16x1xf32>
      tpu.vector_store %arg9[%c0_30, %c0_31], %42 {strides = array<i32>} : memref<16x1xf32, #tpu.memory_space<vmem>>, vector<16x1xf32>,
      %cst_32 = arith.constant 0.000000e+00 : f32
      %44 = vector.broadcast %cst_32 : f32 to vector<16x1xf32>
      %c0_33 = arith.constant 0 : index
      %c0_34 = arith.constant 0 : index
      %45 = vector.load %arg10[%c0_33, %c0_34] : memref<16x1xf32, #tpu.memory_space<vmem>>, vector<16x1xf32>
      tpu.vector_store %arg10[%c0_33, %c0_34], %44 {strides = array<i32>} : memref<16x1xf32, #tpu.memory_space<vmem>>, vector<16x1xf32>,
    } else {
    }
    %c0 = arith.constant 0 : index
    %c0_1 = arith.constant 0 : index
    %3 = vector.load %arg8[%c0, %c0_1] : memref<16x256xbf16, #tpu.memory_space<vmem>>, vector<16x256xbf16>
    %c0_2 = arith.constant 0 : index
    %c0_3 = arith.constant 0 : index
    %4 = vector.load %arg5[%c0_2, %c0_3] : memref<256x128xbf16, #tpu.memory_space<vmem>>, vector<256x128xbf16>
    %cst = arith.constant dense<0.000000e+00> : vector<16x128xf32>
    %5 = tpu.matmul %3, %4, %cst {dimension_numbers = #tpu.dot_dimension_numbers<[1], [0], [0], [1], [0, 0, 1, 1], [], []>} : vector<16x256xbf16>, vector<256x128xbf16>, vector<16x128xf32> -> vector<16x128xf32>
    %c0_4 = arith.constant 0 : index
    %c0_5 = arith.constant 0 : index
    %6 = vector.load %arg6[%c0_4, %c0_5] : memref<1x128xf32, #tpu.memory_space<vmem>>, vector<1x128xf32>
    %7 = vector.broadcast %6 : vector<1x128xf32> to vector<16x128xf32>
    %8 = arith.addf %5, %7 : vector<16x128xf32>
    %c128_i32 = arith.constant 128 : i32
    %9 = arith.muli %arg1, %c128_i32 : i32
    %10 = tpu.assume_multiple %9, 128 : i32
    %c0_6 = arith.constant 0 : index
    %11 = arith.index_cast %10 : i32 to index
    %12 = vector.load %arg7[%c0_6, %11] : memref<16x128xf32, #tpu.memory_space<vmem>>, vector<16x128xf32>
    tpu.vector_store %arg7[%c0_6, %11], %8 {strides = array<i32>} : memref<16x128xf32, #tpu.memory_space<vmem>>, vector<16x128xf32>,
    %c0_7 = arith.constant 0 : index
    %c0_8 = arith.constant 0 : index
    %13 = vector.load %arg9[%c0_7, %c0_8] : memref<16x1xf32, #tpu.memory_space<vmem>>, vector<16x1xf32>
    %cst_9 = arith.constant dense<0xFF800000> : vector<16xf32>
    %14 = vector.multi_reduction <maximumf>, %8, %cst_9 [1] : vector<16x128xf32> to vector<16xf32>
    %15 = vector.shape_cast %14 : vector<16xf32> to vector<16x1xf32>
    %16 = arith.maximumf %13, %15 : vector<16x1xf32>
    %c0_10 = arith.constant 0 : index
    %c0_11 = arith.constant 0 : index
    %17 = vector.load %arg10[%c0_10, %c0_11] : memref<16x1xf32, #tpu.memory_space<vmem>>, vector<16x1xf32>
    %18 = arith.subf %13, %16 : vector<16x1xf32>
    %19 = math.exp %18 : vector<16x1xf32>
    %20 = arith.mulf %17, %19 : vector<16x1xf32>
    %21 = vector.broadcast %16 : vector<16x1xf32> to vector<16x128xf32>
    %22 = arith.subf %8, %21 : vector<16x128xf32>
    %23 = math.exp %22 : vector<16x128xf32>
    %cst_12 = arith.constant dense<0.000000e+00> : vector<16xf32>
    %24 = vector.multi_reduction <add>, %23, %cst_12 [1] : vector<16x128xf32> to vector<16xf32>
    %25 = vector.shape_cast %24 : vector<16xf32> to vector<16x1xf32>
    %26 = arith.addf %20, %25 : vector<16x1xf32>
    %c0_13 = arith.constant 0 : index
    %c0_14 = arith.constant 0 : index
    %27 = vector.load %arg10[%c0_13, %c0_14] : memref<16x1xf32, #tpu.memory_space<vmem>>, vector<16x1xf32>
    tpu.vector_store %arg10[%c0_13, %c0_14], %26 {strides = array<i32>} : memref<16x1xf32, #tpu.memory_space<vmem>>, vector<16x1xf32>,
    %c0_15 = arith.constant 0 : index
    %c0_16 = arith.constant 0 : index
    %28 = vector.load %arg9[%c0_15, %c0_16] : memref<16x1xf32, #tpu.memory_space<vmem>>, vector<16x1xf32>
    tpu.vector_store %arg9[%c0_15, %c0_16], %16 {strides = array<i32>} : memref<16x1xf32, #tpu.memory_space<vmem>>, vector<16x1xf32>,
    %c0_i32_17 = arith.constant 0 : i32
    %29 = arith.cmpi eq, %arg1, %c0_i32_17 : i32
    %30 = arith.extui %29 : i1 to i32
    %c0_i32_18 = arith.constant 0 : i32
    %31 = arith.cmpi ne, %30, %c0_i32_18 : i32
    scf.if %31 {
      %c0_19 = arith.constant 0 : index
      %c0_20 = arith.constant 0 : index
      %32 = vector.load %arg7[%c0_19, %c0_20] : memref<16x128xf32, #tpu.memory_space<vmem>>, vector<16x128xf32>
      %c0_21 = arith.constant 0 : index
      %c0_22 = arith.constant 0 : index
      %33 = vector.load %arg9[%c0_21, %c0_22] : memref<16x1xf32, #tpu.memory_space<vmem>>, vector<16x1xf32>
      %c0_23 = arith.constant 0 : index
      %c0_24 = arith.constant 0 : index
      %34 = vector.load %arg10[%c0_23, %c0_24] : memref<16x1xf32, #tpu.memory_space<vmem>>, vector<16x1xf32>
      %35 = math.log %34 : vector<16x1xf32>
      %36 = arith.addf %33, %35 : vector<16x1xf32>
      %37 = vector.broadcast %36 : vector<16x1xf32> to vector<16x128xf32>
      %38 = arith.subf %32, %37 : vector<16x128xf32>
      %c0_25 = arith.constant 0 : index
      %c0_26 = arith.constant 0 : index
      %39 = vector.load %arg7[%c0_25, %c0_26] : memref<16x128xf32, #tpu.memory_space<vmem>>, vector<16x128xf32>
      tpu.vector_store %arg7[%c0_25, %c0_26], %38 {strides = array<i32>} : memref<16x128xf32, #tpu.memory_space<vmem>>, vector<16x128xf32>,
    } else {
    }
    return
  }
  func.func @transform_0(%arg0: i32, %arg1: i32) -> (i32, i32) {
    %c0_i32 = arith.constant 0 : i32
    %c0_i32_0 = arith.constant 0 : i32
    return %arg0, %c0_i32 : i32, i32
  }
  func.func @transform_1(%arg0: i32, %arg1: i32) -> (i32, i32) {
    %c0_i32 = arith.constant 0 : i32
    %c0_i32_0 = arith.constant 0 : i32
    %c0_i32_1 = arith.constant 0 : i32
    return %c0_i32, %c0_i32_0 : i32, i32
  }
  func.func @transform_2(%arg0: i32, %arg1: i32) -> (i32, i32) {
    %c0_i32 = arith.constant 0 : i32
    %c0_i32_0 = arith.constant 0 : i32
    %c0_i32_1 = arith.constant 0 : i32
    return %c0_i32, %c0_i32_0 : i32, i32
  }
  func.func @transform_3(%arg0: i32, %arg1: i32) -> (i32, i32) {
    %c0_i32 = arith.constant 0 : i32
    %c0_i32_0 = arith.constant 0 : i32
    return %c0_i32, %arg1 : i32, i32
  }
  func.func @transform_4(%arg0: i32, %arg1: i32) -> (i32, i32) {
    %c0_i32 = arith.constant 0 : i32
    %c0_i32_0 = arith.constant 0 : i32
    return %c0_i32, %arg1 : i32, i32
  }
  func.func @transform_5(%arg0: i32, %arg1: i32) -> (i32, i32) {
    %c0_i32 = arith.constant 0 : i32
    %c0_i32_0 = arith.constant 0 : i32
    return %arg0, %c0_i32 : i32, i32
  }
}

</mosaic_0001>

<llo_original>
// kernel: tpu_custom_call.1
$region0: #{tpu_custom_call.1}
  #allocation0 [shape = 'u32[]', space=smem, size = 0x4, offset = 0x4, fixed_abs, tag = 'smem constant byte address 0x4 - core index']
  #allocation1 [shape = 'u32[72,128]{1,0:T(1,128)}', space=vmem, size = 0x9000, scoped, tag = 'internal scratch']
  #allocation2 [shape = 'bf16[16,256]{1,0:T(8,128)(2,1)}', space=vmem, size = 0x2000, scoped, tag = 'scratch operand']
  #allocation3 [shape = 'f32[16,1]{1,0:T(8,128)}', space=vmem, size = 0x2000, scoped, tag = 'scratch operand']
  #allocation4 [shape = 'f32[16,1]{1,0:T(8,128)}', space=vmem, size = 0x2000, scoped, tag = 'scratch operand']
  %s0 = inlined_call_operand.hbm [shape: bf16[16,128], index: 0, kind: input, shape index: {}]
  %s1 = inlined_call_operand.hbm [shape: bf16[128,256], index: 1, kind: input, shape index: {}]
  %s2 = inlined_call_operand.hbm [shape: f32[1,256], index: 2, kind: input, shape index: {}]
  %s3 = inlined_call_operand.hbm [shape: bf16[256,128], index: 3, kind: input, shape index: {}]
  %s4 = inlined_call_operand.vmem [shape: f32[1,128], index: 4, kind: input, shape index: {}]
  %s5 = inlined_call_operand.hbm [shape: f32[16,128], index: 5, kind: output, shape index: {}]
  %s6 = sld [smem:[#allocation0]]
  $region54: #{tpu_custom_call.1} parent=0
    _
  %s8 = ssub.s32 1, %s6
  %s9 = scalar_select 0, %s8, %s6
  $region1: #{tpu_custom_call.1} parent=0
    #allocation5 [shape = 'u8[4096]{0}', space=vmem, size = 0x1000, scoped, tag = 'input window, operand 0, single buffered']
    #allocation6 [shape = 's32[1]{0}', space=sflag, size = 0x4, scoped, tag = 'scoped memory for tpu_custom_call.1']
    #allocation7 [shape = 's32[1]{0}', space=sflag, size = 0x4, scoped, tag = 'scoped memory for tpu_custom_call.1']
    #allocation8 [shape = 'u8[65536]{0}', space=vmem, size = 0x10000, scoped, tag = 'input window, operand 1, single buffered']
    #allocation9 [shape = 's32[1]{0}', space=sflag, size = 0x4, scoped, tag = 'scoped memory for tpu_custom_call.1']
    #allocation10 [shape = 'u8[1024]{0}', space=vmem, size = 0x400, scoped, tag = 'input window, operand 2, single buffered']
    #allocation11 [shape = 'u8[65536]{0}', space=vmem, size = 0x10000, scoped, tag = 'input window, operand 3, single buffered']
    #allocation12 [shape = 's32[1]{0}', space=sflag, size = 0x4, scoped, tag = 'scoped memory for tpu_custom_call.1']
    #allocation13 [shape = 'u8[8192]{0}', space=vmem, size = 0x2000, scoped, tag = 'output window, operand 0, single buffered']
    %10 = vsyncpa [#allocation6], 0
    %11 = vsyncpa [#allocation9], 0
    %12 = vsyncpa [#allocation12], 0
    %13 = vsyncpa [#allocation7], 0
    // Predicated region
    $region2: #{tpu_custom_call.1} parent=1 // pred_check
      _
    $region3: #{tpu_custom_call.1} parent=1 // pred_check_branch
      %15 = sbr.rel (0) target = $region5
    $region4: #{tpu_custom_call.1} parent=1 // pred_region
      %17 = vsyncadd [#allocation6], 0
      %s18 = sshll.u32 %s0, 4
      %s19 = int_to_ptr.hbm [resolvable:$true] %s18
      %s20 = sshll.u32 [#allocation5], 4
      %s21 = int_to_ptr.vmem [resolvable:$true] %s20
      %26 = dma.hbm_to_vmem [thread:$0]  %s19, 128, %s21, [#allocation6], 64, 64, 4
    $region5: #{tpu_custom_call.1} parent=1 // pred_fallthru
      _
    // Predicated region
    $region6: #{tpu_custom_call.1} parent=1 // pred_check
      _
    $region7: #{tpu_custom_call.1} parent=1 // pred_check_branch
      %28 = sbr.rel (0) target = $region9
    $region8: #{tpu_custom_call.1} parent=1 // pred_region
      %30 = vsyncadd [#allocation9], 0
      %s31 = sshll.u32 %s1, 4
      %s32 = int_to_ptr.hbm [resolvable:$true] %s31
      %s33 = sshll.u32 [#allocation8], 4
      %s34 = int_to_ptr.vmem [resolvable:$true] %s33
      %39 = dma.hbm_to_vmem [thread:$0]  %s32, 2048, %s34, [#allocation9], 128, 128, 8
    $region9: #{tpu_custom_call.1} parent=1 // pred_fallthru
      _
    // Predicated region
    $region10: #{tpu_custom_call.1} parent=1 // pred_check
      _
    $region11: #{tpu_custom_call.1} parent=1 // pred_check_branch
      %41 = sbr.rel (0) target = $region13
    $region12: #{tpu_custom_call.1} parent=1 // pred_region
      %43 = vsyncadd [#allocation9], 0
      %s45 = sshll.u32 %s2, 4
      %s46 = int_to_ptr.hbm [resolvable:$true] %s45
      %s47 = sshll.u32 [#allocation10], 4
      %s48 = int_to_ptr.vmem [resolvable:$true] %s47
      %50 = dma.hbm_to_vmem [thread:$0]  %s46, 32, %s48, [#allocation9]
    $region13: #{tpu_custom_call.1} parent=1 // pred_fallthru
      _
    // Predicated region
    $region14: #{tpu_custom_call.1} parent=1 // pred_check
      _
    $region15: #{tpu_custom_call.1} parent=1 // pred_check_branch
      %52 = sbr.rel (0) target = $region17
    $region16: #{tpu_custom_call.1} parent=1 // pred_region
      %54 = vsyncadd [#allocation12], 0
      %s55 = sshll.u32 %s3, 4
      %s56 = int_to_ptr.hbm [resolvable:$true] %s55
      %s57 = sshll.u32 [#allocation11], 4
      %s58 = int_to_ptr.vmem [resolvable:$true] %s57
      %63 = dma.hbm_to_vmem [thread:$0]  %s56, 2048, %s58, [#allocation12], 64, 64, 4
    $region17: #{tpu_custom_call.1} parent=1 // pred_fallthru
      _
    // Predicated region
    $region18: #{tpu_custom_call.1} parent=1 // pred_check
      _
    $region19: #{tpu_custom_call.1} parent=1 // pred_check_branch
      %65 = sbr.rel (0) target = $region21
    $region20: #{tpu_custom_call.1} parent=1 // pred_region
      _
    $region21: #{tpu_custom_call.1} parent=1 // pred_fallthru
      _
    // Predicated region
    $region22: #{tpu_custom_call.1} parent=1 // pred_check
      _
    $region23: #{tpu_custom_call.1} parent=1 // pred_check_branch
      %67 = sbr.rel (0) target = $region25
    $region24: #{tpu_custom_call.1} parent=1 // pred_region
      %69 = dma.done [#allocation6], 128
    $region25: #{tpu_custom_call.1} parent=1 // pred_fallthru
      _
    // Predicated region
    $region26: #{tpu_custom_call.1} parent=1 // pred_check
      _
    $region27: #{tpu_custom_call.1} parent=1 // pred_check_branch
      %71 = sbr.rel (0) target = $region29
    $region28: #{tpu_custom_call.1} parent=1 // pred_region
      %73 = dma.done [#allocation9], 2048
    $region29: #{tpu_custom_call.1} parent=1 // pred_fallthru
      _
    // Predicated region
    $region30: #{tpu_custom_call.1} parent=1 // pred_check
      _
    $region31: #{tpu_custom_call.1} parent=1 // pred_check_branch
      %75 = sbr.rel (0) target = $region33
    $region32: #{tpu_custom_call.1} parent=1 // pred_region
      %77 = dma.done [#allocation9], 32
    $region33: #{tpu_custom_call.1} parent=1 // pred_fallthru
      _
    // Predicated region
    $region34: #{tpu_custom_call.1} parent=1 // pred_check
      _
    $region35: #{tpu_custom_call.1} parent=1 // pred_check_branch
      %79 = sbr.rel (0) target = $region37
    $region36: #{tpu_custom_call.1} parent=1 // pred_region
      %81 = dma.done [#allocation12], 2048
    $region37: #{tpu_custom_call.1} parent=1 // pred_fallthru
      _
    %p82 = scmp.eq.s32.totalorder 0, 0
    // Predicated region
    $region38: #{tpu_custom_call.1} parent=1 // pred_check
      %p83 = pneg %p82
    $region39: #{tpu_custom_call.1} parent=1 // pred_check_branch
      %85 = sbr.rel (%p83) target = $region41
    $region40: #{tpu_custom_call.1} parent=1 // pred_region
      %v86 = vld [vmem:[#allocation5] sm:$0xf]
      %v87 = vld [vmem:[#allocation5 + $0x4] sm:$0xf]
      %v88 = vld [vmem:[#allocation8] sm:$0xff]
      %v89 = vld [vmem:[#allocation8 + $0x8] sm:$0xff]
      %v90 = vld [vmem:[#allocation8 + $0x10] sm:$0xff]
      %v91 = vld [vmem:[#allocation8 + $0x18] sm:$0xff]
      %v92 = vld [vmem:[#allocation8 + $0x20] sm:$0xff]
      %v93 = vld [vmem:[#allocation8 + $0x28] sm:$0xff]
      %v94 = vld [vmem:[#allocation8 + $0x30] sm:$0xff]
      %v95 = vld [vmem:[#allocation8 + $0x38] sm:$0xff]
      %v96 = vld [vmem:[#allocation8 + $0x40] sm:$0xff]
      %v97 = vld [vmem:[#allocation8 + $0x48] sm:$0xff]
      %v98 = vld [vmem:[#allocation8 + $0x50] sm:$0xff]
      %v99 = vld [vmem:[#allocation8 + $0x58] sm:$0xff]
      %v100 = vld [vmem:[#allocation8 + $0x60] sm:$0xff]
      %v101 = vld [vmem:[#allocation8 + $0x68] sm:$0xff]
      %v102 = vld [vmem:[#allocation8 + $0x70] sm:$0xff]
      %v103 = vld [vmem:[#allocation8 + $0x78] sm:$0xff]
      %v104 = vld [vmem:[#allocation10] sm:$0x3]
      %v106 = vperm.slane %v104, 0
      %v107 = vperm.slane %v104, 1
      %v112 = vunpack.c.l.b16 %v86
      %v113 = vunpack.c.l.b16 %v87
      %v114 = vpack.c.b16 %v113, %v112
      %v132 = vunpack.c.l.b16 %v88
      %v133 = vunpack.c.h.b16 %v88
      %v134 = vunpack.c.l.b16 %v89
      %v135 = vunpack.c.h.b16 %v89
      %v136 = vunpack.c.l.b16 %v90
      %v137 = vunpack.c.h.b16 %v90
      %v138 = vunpack.c.l.b16 %v91
      %v139 = vunpack.c.h.b16 %v91
      %v140 = vunpack.c.l.b16 %v92
      %v141 = vunpack.c.h.b16 %v92
      %v142 = vunpack.c.l.b16 %v93
      %v143 = vunpack.c.h.b16 %v93
      %v144 = vunpack.c.l.b16 %v94
      %v145 = vunpack.c.h.b16 %v94
      %v146 = vunpack.c.l.b16 %v95
      %v147 = vunpack.c.h.b16 %v95
      %v148 = vunpack.c.l.b16 %v96
      %v149 = vunpack.c.h.b16 %v96
      %v150 = vunpack.c.l.b16 %v97
      %v151 = vunpack.c.h.b16 %v97
      %v152 = vunpack.c.l.b16 %v98
      %v153 = vunpack.c.h.b16 %v98
      %v154 = vunpack.c.l.b16 %v99
      %v155 = vunpack.c.h.b16 %v99
      %v156 = vunpack.c.l.b16 %v100
      %v157 = vunpack.c.h.b16 %v100
      %v158 = vunpack.c.l.b16 %v101
      %v159 = vunpack.c.h.b16 %v101
      %v160 = vunpack.c.l.b16 %v102
      %v161 = vunpack.c.h.b16 %v102
      %v162 = vunpack.c.l.b16 %v103
      %v163 = vunpack.c.h.b16 %v103
      %v164 = vpack.c.b16 %v134, %v132
      %v165 = vpack.c.b16 %v135, %v133
      %v166 = vpack.c.b16 %v138, %v136
      %v167 = vpack.c.b16 %v139, %v137
      %v168 = vpack.c.b16 %v142, %v140
      %v169 = vpack.c.b16 %v143, %v141
      %v170 = vpack.c.b16 %v146, %v144
      %v171 = vpack.c.b16 %v147, %v145
      %v172 = vpack.c.b16 %v150, %v148
      %v173 = vpack.c.b16 %v151, %v149
      %v174 = vpack.c.b16 %v154, %v152
      %v175 = vpack.c.b16 %v155, %v153
      %v176 = vpack.c.b16 %v158, %v156
      %v177 = vpack.c.b16 %v159, %v157
      %v178 = vpack.c.b16 %v162, %v160
      %v179 = vpack.c.b16 %v163, %v161
      %196 = vmatpush.bf16.msra.mxu0 %v178
      %197 = vmatpush.bf16.msra.mxu0 %v176
      %198 = vmatpush.bf16.msra.mxu0 %v174
      %199 = vmatpush.bf16.msra.mxu0 %v172
      %200 = vmatpush.bf16.msra.mxu0 %v170
      %201 = vmatpush.bf16.msra.mxu0 %v168
      %202 = vmatpush.bf16.msra.mxu0 %v166
      %203 = vmatpush.bf16.msra.mxu0 %v164
      %204 = vmatmul.bf16.gmra.mxu0 %v114
      %v205 = vpop.f32.mrf.mxu0
      %v206 = vadd.f32 %v106, %v205
      %v207 = vpop.f32.mrf.mxu0
      %v208 = vadd.f32 %v106, %v207
      %209 = vdwg.mxu0
      %210 = vmatpush.bf16.msra.mxu0 %v179
      %211 = vmatpush.bf16.msra.mxu0 %v177
      %212 = vmatpush.bf16.msra.mxu0 %v175
      %213 = vmatpush.bf16.msra.mxu0 %v173
      %214 = vmatpush.bf16.msra.mxu0 %v171
      %215 = vmatpush.bf16.msra.mxu0 %v169
      %216 = vmatpush.bf16.msra.mxu0 %v167
      %217 = vmatpush.bf16.msra.mxu0 %v165
      %218 = vmatmul.bf16.gmra.mxu0 %v114
      %v219 = vpop.f32.mrf.mxu0
      %v220 = vadd.f32 %v107, %v219
      %v221 = vpop.f32.mrf.mxu0
      %v222 = vadd.f32 %v107, %v221
      %223 = vdwg.mxu0
      %v224 = vmax.f32 %v206, 0.0
      %v225 = vmax.f32 %v220, 0.0
      %v226 = vmax.f32 %v208, 0.0
      %v227 = vmax.f32 %v222, 0.0
      %v228 = vpack.c.bf16 %v225, %v224
      %v229 = vpack.c.bf16 %v227, %v226
      %230 = vst [vmem:[#allocation2] sm:$0xff] %v228
      %231 = vst [vmem:[#allocation2 + $0x8] sm:$0xff] %v229
      %vm232 = vcmask 7168
      %233 = vst.msk [vmem:[#allocation3] sm:$0xff] %vm232, -1e+30
      %234 = vst.msk [vmem:[#allocation3 + $0x8] sm:$0xff] %vm232, -1e+30
      %235 = vst.msk [vmem:[#allocation4] sm:$0xff] %vm232, 0.0
      %236 = vst.msk [vmem:[#allocation4 + $0x8] sm:$0xff] %vm232, 0.0
    $region41: #{tpu_custom_call.1} parent=1 // pred_fallthru
      _
    %v237 = vld [vmem:[#allocation2] sm:$0xff]
    %v238 = vld [vmem:[#allocation2 + $0x8] sm:$0xff]
    %v239 = vld [vmem:[#allocation11] sm:$0xf]
    %v240 = vld [vmem:[#allocation11 + $0x4] sm:$0xf]
    %v241 = vld [vmem:[#allocation11 + $0x8] sm:$0xf]
    %v242 = vld [vmem:[#allocation11 + $0xc] sm:$0xf]
    %v243 = vld [vmem:[#allocation11 + $0x10] sm:$0xf]
    %v244 = vld [vmem:[#allocation11 + $0x14] sm:$0xf]
    %v245 = vld [vmem:[#allocation11 + $0x18] sm:$0xf]
    %v246 = vld [vmem:[#allocation11 + $0x1c] sm:$0xf]
    %v247 = vld [vmem:[#allocation11 + $0x20] sm:$0xf]
    %v248 = vld [vmem:[#allocation11 + $0x24] sm:$0xf]
    %v249 = vld [vmem:[#allocation11 + $0x28] sm:$0xf]
    %v250 = vld [vmem:[#allocation11 + $0x2c] sm:$0xf]
    %v251 = vld [vmem:[#allocation11 + $0x30] sm:$0xf]
    %v252 = vld [vmem:[#allocation11 + $0x34] sm:$0xf]
    %v253 = vld [vmem:[#allocation11 + $0x38] sm:$0xf]
    %v254 = vld [vmem:[#allocation11 + $0x3c] sm:$0xf]
    %v255 = vld [vmem:[#allocation11 + $0x40] sm:$0xf]
    %v256 = vld [vmem:[#allocation11 + $0x44] sm:$0xf]
    %v257 = vld [vmem:[#allocation11 + $0x48] sm:$0xf]
    %v258 = vld [vmem:[#allocation11 + $0x4c] sm:$0xf]
    %v259 = vld [vmem:[#allocation11 + $0x50] sm:$0xf]
    %v260 = vld [vmem:[#allocation11 + $0x54] sm:$0xf]
    %v261 = vld [vmem:[#allocation11 + $0x58] sm:$0xf]
    %v262 = vld [vmem:[#allocation11 + $0x5c] sm:$0xf]
    %v263 = vld [vmem:[#allocation11 + $0x60] sm:$0xf]
    %v264 = vld [vmem:[#allocation11 + $0x64] sm:$0xf]
    %v265 = vld [vmem:[#allocation11 + $0x68] sm:$0xf]
    %v266 = vld [vmem:[#allocation11 + $0x6c] sm:$0xf]
    %v267 = vld [vmem:[#allocation11 + $0x70] sm:$0xf]
    %v268 = vld [vmem:[#allocation11 + $0x74] sm:$0xf]
    %v269 = vld [vmem:[#allocation11 + $0x78] sm:$0xf]
    %v270 = vld [vmem:[#allocation11 + $0x7c] sm:$0xf]
    %v271 = vld [vmem:[%s4] sm:$0x1]
    %v273 = vperm.slane %v271, 0
    %v277 = vunpack.c.l.b16 %v237
    %v278 = vunpack.c.h.b16 %v237
    %v279 = vunpack.c.l.b16 %v238
    %v280 = vunpack.c.h.b16 %v238
    %v281 = vpack.c.b16 %v279, %v277
    %v282 = vpack.c.b16 %v280, %v278
    %v317 = vunpack.c.l.b16 %v239
    %v318 = vunpack.c.l.b16 %v240
    %v319 = vunpack.c.l.b16 %v241
    %v320 = vunpack.c.l.b16 %v242
    %v321 = vunpack.c.l.b16 %v243
    %v322 = vunpack.c.l.b16 %v244
    %v323 = vunpack.c.l.b16 %v245
    %v324 = vunpack.c.l.b16 %v246
    %v325 = vunpack.c.l.b16 %v247
    %v326 = vunpack.c.l.b16 %v248
    %v327 = vunpack.c.l.b16 %v249
    %v328 = vunpack.c.l.b16 %v250
    %v329 = vunpack.c.l.b16 %v251
    %v330 = vunpack.c.l.b16 %v252
    %v331 = vunpack.c.l.b16 %v253
    %v332 = vunpack.c.l.b16 %v254
    %v333 = vunpack.c.l.b16 %v255
    %v334 = vunpack.c.l.b16 %v256
    %v335 = vunpack.c.l.b16 %v257
    %v336 = vunpack.c.l.b16 %v258
    %v337 = vunpack.c.l.b16 %v259
    %v338 = vunpack.c.l.b16 %v260
    %v339 = vunpack.c.l.b16 %v261
    %v340 = vunpack.c.l.b16 %v262
    %v341 = vunpack.c.l.b16 %v263
    %v342 = vunpack.c.l.b16 %v264
    %v343 = vunpack.c.l.b16 %v265
    %v344 = vunpack.c.l.b16 %v266
    %v345 = vunpack.c.l.b16 %v267
    %v346 = vunpack.c.l.b16 %v268
    %v347 = vunpack.c.l.b16 %v269
    %v348 = vunpack.c.l.b16 %v270
    %v349 = vpack.c.b16 %v318, %v317
    %v350 = vpack.c.b16 %v320, %v319
    %v351 = vpack.c.b16 %v322, %v321
    %v352 = vpack.c.b16 %v324, %v323
    %v353 = vpack.c.b16 %v326, %v325
    %v354 = vpack.c.b16 %v328, %v327
    %v355 = vpack.c.b16 %v330, %v329
    %v356 = vpack.c.b16 %v332, %v331
    %v357 = vpack.c.b16 %v334, %v333
    %v358 = vpack.c.b16 %v336, %v335
    %v359 = vpack.c.b16 %v338, %v337
    %v360 = vpack.c.b16 %v340, %v339
    %v361 = vpack.c.b16 %v342, %v341
    %v362 = vpack.c.b16 %v344, %v343
    %v363 = vpack.c.b16 %v346, %v345
    %v364 = vpack.c.b16 %v348, %v347
    %381 = vmatpush.bf16.msra.mxu0 %v356
    %382 = vmatpush.bf16.msra.mxu0 %v355
    %383 = vmatpush.bf16.msra.mxu0 %v354
    %384 = vmatpush.bf16.msra.mxu0 %v353
    %385 = vmatpush.bf16.msra.mxu0 %v352
    %386 = vmatpush.bf16.msra.mxu0 %v351
    %387 = vmatpush.bf16.msra.mxu0 %v350
    %388 = vmatpush.bf16.msra.mxu0 %v349
    %389 = vmatmul.bf16.gmra.mxu0 %v281
    %v390 = vpop.f32.mrf.mxu0
    %v391 = vadd.f32 %v273, %v390
    %v392 = vpop.f32.mrf.mxu0
    %v393 = vadd.f32 %v273, %v392
    %394 = vdwg.mxu0
    %395 = vmatpush.bf16.msra.mxu0 %v364
    %396 = vmatpush.bf16.msra.mxu0 %v363
    %397 = vmatpush.bf16.msra.mxu0 %v362
    %398 = vmatpush.bf16.msra.mxu0 %v361
    %399 = vmatpush.bf16.msra.mxu0 %v360
    %400 = vmatpush.bf16.msra.mxu0 %v359
    %401 = vmatpush.bf16.msra.mxu0 %v358
    %402 = vmatpush.bf16.msra.mxu0 %v357
    %403 = vmatmul.bf16.gmra.mxu0 %v282
    %v404 = vpop.f32.mrf.mxu0
    %v405 = vadd.f32 %v391, %v404
    %v406 = vpop.f32.mrf.mxu0
    %v407 = vadd.f32 %v393, %v406
    %408 = vdwg.mxu0
    %s409 = smul.u32 0, 128
    %s410 = sshra.s32 %s409, 7
    %s411 = sand.u32 %s409, 127
    %s412 = scalar_lea.vmem [#allocation13], %s410
    %413 = vst [vmem:[%s412] sm:$0xff] %v405
    %414 = vst [vmem:[%s412 + $0x8] sm:$0xff] %v407
    %v415 = vld [vmem:[#allocation3] sm:$0xff]
    %v416 = vld [vmem:[#allocation3 + $0x8] sm:$0xff]
    %417 = vmax.xlane.f32.xlu0 %v405
    %v418 = vpop.xlane.xlu0 %417
    %419 = vmax.xlane.f32.xlu0 %v407
    %v420 = vpop.xlane.xlu0 %419
    %v421 = vmax.f32 %v415, %v418
    %v422 = vmax.f32 %v416, %v420
    %v423 = vld [vmem:[#allocation4] sm:$0xff]
    %v424 = vld [vmem:[#allocation4 + $0x8] sm:$0xff]
    %v425 = vsub.f32 %v415, %v421
    %v426 = vsub.f32 %v416, %v422
    %v427 = vmul.f32 %v425, 1.442695
    %v428 = vpow.pop %v427
    %v429 = vmul.f32 %v426, 1.442695
    %v430 = vpow.pop %v429
    %v431 = vmul.f32 %v423, %v428
    %v432 = vmul.f32 %v424, %v430
    %434 = vset.pattern.permute.xlu0 0
    %435 = vperm.xlu0 %434, %v421
    %v436 = vpop.permute.xlu0 %435
    %439 = vset.pattern.permute.xlu0 0
    %440 = vperm.xlu0 %439, %v422
    %v441 = vpop.permute.xlu0 %440
    %v443 = vsub.f32 %v405, %v436
    %v444 = vsub.f32 %v407, %v441
    %v445 = vmul.f32 %v443, 1.442695
    %v446 = vpow.pop %v445
    %v447 = vmul.f32 %v444, 1.442695
    %v448 = vpow.pop %v447
    %449 = vadd.xlane.f32.xlu0 %v446
    %v450 = vpop.xlane.xlu0 %449
    %451 = vadd.xlane.f32.xlu0 %v448
    %v452 = vpop.xlane.xlu0 %451
    %v453 = vadd.f32 %v431, %v450
    %v454 = vadd.f32 %v432, %v452
    %vm455 = vcmask 7168
    %456 = vst.msk [vmem:[#allocation4] sm:$0xff] %vm455, %v453
    %457 = vst.msk [vmem:[#allocation4 + $0x8] sm:$0xff] %vm455, %v454
    %458 = vst.msk [vmem:[#allocation3] sm:$0xff] %vm455, %v421
    %459 = vst.msk [vmem:[#allocation3 + $0x8] sm:$0xff] %vm455, %v422
    // Predicated region
    $region42: #{tpu_custom_call.1} parent=1 // pred_check
      %p460 = pneg %p82
    $region43: #{tpu_custom_call.1} parent=1 // pred_check_branch
      %462 = sbr.rel (%p460) target = $region45
    $region44: #{tpu_custom_call.1} parent=1 // pred_region
      %v463 = vld [vmem:[#allocation13] sm:$0xff]
      %v464 = vld [vmem:[#allocation13 + $0x8] sm:$0xff]
      %v465 = vld [vmem:[#allocation3] sm:$0xff]
      %v466 = vld [vmem:[#allocation3 + $0x8] sm:$0xff]
      %v467 = vld [vmem:[#allocation4] sm:$0xff]
      %v468 = vld [vmem:[#allocation4 + $0x8] sm:$0xff]
      %v469 = vlog2.pop %v467
      %v470 = vmul.f32 %v469, 0.6931472
      %v471 = vlog2.pop %v468
      %v472 = vmul.f32 %v471, 0.6931472
      %v473 = vadd.f32 %v465, %v470
      %v474 = vadd.f32 %v466, %v472
      %476 = vset.pattern.permute.xlu0 0
      %477 = vperm.xlu0 %476, %v473
      %v478 = vpop.permute.xlu0 %477
      %481 = vset.pattern.permute.xlu0 0
      %482 = vperm.xlu0 %481, %v474
      %v483 = vpop.permute.xlu0 %482
      %v485 = vsub.f32 %v463, %v478
      %v486 = vsub.f32 %v464, %v483
      %487 = vst [vmem:[#allocation13] sm:$0xff] %v485
      %488 = vst [vmem:[#allocation13 + $0x8] sm:$0xff] %v486
    $region45: #{tpu_custom_call.1} parent=1 // pred_fallthru
      _
    // Predicated region
    $region46: #{tpu_custom_call.1} parent=1 // pred_check
      _
    $region47: #{tpu_custom_call.1} parent=1 // pred_check_branch
      %490 = sbr.rel (0) target = $region49
    $region48: #{tpu_custom_call.1} parent=1 // pred_region
      %492 = vsyncadd [#allocation7], 0
      %s493 = sshll.u32 [#allocation13], 4
      %s494 = int_to_ptr.vmem [resolvable:$true] %s493
      %s495 = sshll.u32 %s5, 4
      %s496 = int_to_ptr.hbm [resolvable:$true] %s495
      %501 = dma.vmem_to_hbm [thread:$0]  %s494, 256, %s496, [#allocation7], 128, 128, 8
    $region49: #{tpu_custom_call.1} parent=1 // pred_fallthru
      _
    // Predicated region
    $region50: #{tpu_custom_call.1} parent=1 // pred_check
      _
    $region51: #{tpu_custom_call.1} parent=1 // pred_check_branch
      %503 = sbr.rel (0) target = $region53
    $region52: #{tpu_custom_call.1} parent=1 // pred_region
      %505 = dma.done [#allocation7], 256
    $region53: #{tpu_custom_call.1} parent=1 // pred_fallthru
      _
    %506 = vsyncpa [#allocation6], 1
    %507 = vsyncpa [#allocation9], 1
    %508 = vsyncpa [#allocation12], 1
    %509 = vsyncpa [#allocation7], 1

</llo_original>
